<compile_context>
chip_gen: v7x
topology: tpu7x:2x2x1
jax: 0.10.0
libtpu: 0.0.40
codegen_flags: <defaults>
</compile_context>

<pallas_src>
import jax
import jax.numpy as jnp
from jax.experimental import pallas as pl
from jax.experimental.pallas import tpu as pltpu


def _round_up(x, m):
    return ((x + m - 1) // m) * m


def _pick_tile_hw(hwp, c1, c2, itemsize, vmem_budget=10 * 1024 * 1024):
    """Largest HW tile (multiple of 128, dividing hwp) whose double-buffered
    input+output footprint (plus resident weight/bias) fits the budget."""
    per_elem = 2 * (3 * c1 + c2) * itemsize          # 3 inputs + 1 output, double-buffered
    resident = (c1 * c2 + c2) * 4                    # conv weight + bias (resident)
    cands = sorted({hwp, 4096, 2048, 1024, 512, 256, 128}, reverse=True)
    for t in cands:
        if t <= hwp and hwp % t == 0 and per_elem * t + resident <= vmem_budget:
            return t
    return 128


def _bifpn_add3_kernel(fw_ref, x0_ref, x1_ref, x2_ref, w_ref, bias_ref, o_ref):
    # fw_ref: (3,) normalized fusion weights in SMEM.
    w0 = fw_ref[0]
    w1 = fw_ref[1]
    w2 = fw_ref[2]
    # Weighted 3-way add (VPU) + SiLU (EUP), f32 math.
    s = w0 * x0_ref[0] + w1 * x1_ref[0] + w2 * x2_ref[0]          # (C1, T)
    s = s * jax.nn.sigmoid(s)
    # 1x1 conv == (C2, C1) @ (C1, T) on the MXU; bias (C2, 1) broadcasts over lanes.
    y = jnp.dot(w_ref[...], s, preferred_element_type=jnp.float32) + bias_ref[...]
    o_ref[0] = y.astype(o_ref.dtype)                              # lane-dense store


def bifpn_add3_forward(x0, x1, x2, fusion_w, conv_weight, conv_bias, *, epsilon=1e-4):
    """Equivalent of BiFPN_Add3.forward([x0, x1, x2]).

    x0, x1, x2  : (N, C1, H, W)  NCHW (PyTorch layout)
    fusion_w    : (3,)           learnable fusion weights (pre-normalization)
    conv_weight : (C2, C1, 1, 1) 1x1 conv weight
    conv_bias   : (C2,)
    returns     : (N, C2, H, W)
    """
    N, C1, H, W = x0.shape
    C2 = conv_weight.shape[0]
    HW = H * W
    itemsize = jnp.dtype(x0.dtype).itemsize

    # Normalized fusion weights (3 scalars) -- tiny, done in plain JAX.
    fw = (fusion_w / (jnp.sum(fusion_w) + epsilon)).astype(jnp.float32)

    # NCHW is already channel-major: (N, C1, H, W) -> (N, C1, H*W) is a free view.
    a = x0.reshape(N, C1, HW)
    b = x1.reshape(N, C1, HW)
    c = x2.reshape(N, C1, HW)

    w2d = conv_weight.reshape(C2, C1).astype(x0.dtype)   # pre-cast; no cast in kernel
    bias2d = conv_bias.reshape(C2, 1).astype(jnp.float32)

    # Minimal lane padding (<= 127 elements per row), then pick a dividing tile.
    HWp = _round_up(HW, 128)
    tile = _pick_tile_hw(HWp, C1, C2, itemsize)
    if HWp != HW:
        pad = ((0, 0), (0, 0), (0, HWp - HW))
        a = jnp.pad(a, pad)
        b = jnp.pad(b, pad)
        c = jnp.pad(c, pad)
    grid = (N, HWp // tile)

    cost = pl.CostEstimate(
        flops=2 * N * HW * C1 * C2 + 4 * N * HW * C1,
        transcendentals=N * HW * C1,
        bytes_accessed=itemsize * (3 * N * HW * C1 + N * HW * C2 + C1 * C2) + 4 * (C2 + 3),
    )

    out = pl.pallas_call(
        _bifpn_add3_kernel,
        out_shape=jax.ShapeDtypeStruct((N, C2, HWp), x0.dtype),
        grid_spec=pltpu.PrefetchScalarGridSpec(
            num_scalar_prefetch=0,
            grid=grid,
            in_specs=[
                pl.BlockSpec(memory_space=pltpu.MemorySpace.SMEM),    # fw (3,) scalars
                pl.BlockSpec((1, C1, tile), lambda n, j: (n, 0, j)),  # x0 tile
                pl.BlockSpec((1, C1, tile), lambda n, j: (n, 0, j)),  # x1 tile
                pl.BlockSpec((1, C1, tile), lambda n, j: (n, 0, j)),  # x2 tile
                pl.BlockSpec((C2, C1), lambda n, j: (0, 0)),          # conv weight (resident)
                pl.BlockSpec((C2, 1), lambda n, j: (0, 0)),           # bias (resident)
            ],
            out_specs=pl.BlockSpec((1, C2, tile), lambda n, j: (n, 0, j)),
        ),
        compiler_params=pltpu.CompilerParams(
            dimension_semantics=("parallel", "parallel"),
            vmem_limit_bytes=32 * 1024 * 1024,   # safe on v5e/v6e/v7x; tiles budgeted well under
        ),
        cost_estimate=cost,
    )(fw, a, b, c, w2d, bias2d)

    if HWp != HW:
        out = out[:, :, :HW]
    return out.reshape(N, C2, H, W)


def _reference(x0, x1, x2, fusion_w, conv_weight, conv_bias, epsilon=1e-4):
    # Pure-JAX reference matching the PyTorch BiFPN_Add3 forward.
    fw = fusion_w / (jnp.sum(fusion_w) + epsilon)
    s = fw[0] * x0 + fw[1] * x1 + fw[2] * x2
    s = s * jax.nn.sigmoid(s)
    y = jnp.einsum('nchw,oc->nohw', s,
                   conv_weight.reshape(conv_weight.shape[0], conv_weight.shape[1]))
    return y + conv_bias.reshape(1, -1, 1, 1)


if __name__ == "__main__":
    key = jax.random.PRNGKey(0)
    N, C1, C2, H, W = 2, 4, 8, 16, 16

    k0, k1, k2, kw, kb, kf = jax.random.split(key, 6)
    x0 = jax.random.normal(k0, (N, C1, H, W), dtype=jnp.float32)
    x1 = jax.random.normal(k1, (N, C1, H, W), dtype=jnp.float32)
    x2 = jax.random.normal(k2, (N, C1, H, W), dtype=jnp.float32)

    # PyTorch init is torch.ones(3); use positive random values to exercise the
    # normalized-weight path non-trivially.
    fusion_w = jax.random.uniform(kf, (3,), jnp.float32, 0.5, 1.5)

    # Conv2d(c1, c2, 1) kaiming-uniform-ish init.
    fan_in = C1 * 1 * 1
    bound = 1.0 / (fan_in ** 0.5)
    conv_weight = jax.random.uniform(kw, (C2, C1, 1, 1), jnp.float32, -bound, bound)
    conv_bias = jax.random.uniform(kb, (C2,), jnp.float32, -bound, bound)

    out = bifpn_add3_forward(x0, x1, x2, fusion_w, conv_weight, conv_bias)
    out = jax.block_until_ready(out)

    ref = _reference(x0, x1, x2, fusion_w, conv_weight, conv_bias)
    assert out.shape == (N, C2, H, W)
    assert jnp.allclose(out, ref, atol=2e-5, rtol=2e-5), float(jnp.max(jnp.abs(out - ref)))

    print("KERNEL_OK")
</pallas_src>

<mosaic_0001>
module attributes {stable_mosaic.version = 11 : i64} {
  func.func @_bifpn_add3_kernel(%arg0: i32, %arg1: i32, %arg2: memref<3xf32, #tpu.memory_space<smem>>, %arg3: memref<1x4x256xf32, #tpu.memory_space<vmem>>, %arg4: memref<1x4x256xf32, #tpu.memory_space<vmem>>, %arg5: memref<1x4x256xf32, #tpu.memory_space<vmem>>, %arg6: memref<8x4xf32, #tpu.memory_space<vmem>>, %arg7: memref<8x1xf32, #tpu.memory_space<vmem>>, %arg8: memref<1x8x256xf32, #tpu.memory_space<vmem>>) attributes {dimension_semantics = [#tpu.dimension_semantics<parallel>, #tpu.dimension_semantics<parallel>], iteration_bounds = array<i64: 2, 1>, scalar_prefetch = 0 : i64, scratch_operands = 0 : i64, tpu.core_type = #tpu.core_type<tc>, window_params = [{transform_indices = @transform_0, window_bounds = array<i64: 3>}, {transform_indices = @transform_1, window_bounds = array<i64: 1, 4, 256>}, {transform_indices = @transform_2, window_bounds = array<i64: 1, 4, 256>}, {transform_indices = @transform_3, window_bounds = array<i64: 1, 4, 256>}, {pipeline_mode = #tpu.pipeline_mode<synchronous>, transform_indices = @transform_4, window_bounds = array<i64: 8, 4>}, {pipeline_mode = #tpu.pipeline_mode<synchronous>, transform_indices = @transform_5, window_bounds = array<i64: 8, 1>}, {transform_indices = @transform_6, window_bounds = array<i64: 1, 8, 256>}]} {
    %c0 = arith.constant 0 : index
    %0 = memref.load %arg2[%c0] : memref<3xf32, #tpu.memory_space<smem>>
    %c1 = arith.constant 1 : index
    %1 = memref.load %arg2[%c1] : memref<3xf32, #tpu.memory_space<smem>>
    %c2 = arith.constant 2 : index
    %2 = memref.load %arg2[%c2] : memref<3xf32, #tpu.memory_space<smem>>
    %c0_0 = arith.constant 0 : index
    %c0_1 = arith.constant 0 : index
    %c0_2 = arith.constant 0 : index
    %3 = vector.load %arg3[%c0_0, %c0_1, %c0_2] : memref<1x4x256xf32, #tpu.memory_space<vmem>>, vector<1x4x256xf32>
    %4 = vector.shape_cast %3 : vector<1x4x256xf32> to vector<4x256xf32>
    %5 = vector.broadcast %0 : f32 to vector<4x256xf32>
    %6 = arith.mulf %5, %4 : vector<4x256xf32>
    %c0_3 = arith.constant 0 : index
    %c0_4 = arith.constant 0 : index
    %c0_5 = arith.constant 0 : index
    %7 = vector.load %arg4[%c0_3, %c0_4, %c0_5] : memref<1x4x256xf32, #tpu.memory_space<vmem>>, vector<1x4x256xf32>
    %8 = vector.shape_cast %7 : vector<1x4x256xf32> to vector<4x256xf32>
    %9 = vector.broadcast %1 : f32 to vector<4x256xf32>
    %10 = arith.mulf %9, %8 : vector<4x256xf32>
    %11 = arith.addf %6, %10 : vector<4x256xf32>
    %c0_6 = arith.constant 0 : index
    %c0_7 = arith.constant 0 : index
    %c0_8 = arith.constant 0 : index
    %12 = vector.load %arg5[%c0_6, %c0_7, %c0_8] : memref<1x4x256xf32, #tpu.memory_space<vmem>>, vector<1x4x256xf32>
    %13 = vector.shape_cast %12 : vector<1x4x256xf32> to vector<4x256xf32>
    %14 = vector.broadcast %2 : f32 to vector<4x256xf32>
    %15 = arith.mulf %14, %13 : vector<4x256xf32>
    %16 = arith.addf %11, %15 : vector<4x256xf32>
    %17 = arith.negf %16 : vector<4x256xf32>
    %18 = math.exp %17 : vector<4x256xf32>
    %cst = arith.constant 1.000000e+00 : f32
    %19 = vector.broadcast %cst : f32 to vector<4x256xf32>
    %20 = arith.addf %19, %18 : vector<4x256xf32>
    %21 = arith.divf %19, %20 : vector<4x256xf32>
    %22 = arith.mulf %16, %21 : vector<4x256xf32>
    %c0_9 = arith.constant 0 : index
    %c0_10 = arith.constant 0 : index
    %23 = vector.load %arg6[%c0_9, %c0_10] : memref<8x4xf32, #tpu.memory_space<vmem>>, vector<8x4xf32>
    %cst_11 = arith.constant dense<0.000000e+00> : vector<8x256xf32>
    %24 = tpu.matmul %23, %22, %cst_11 {dimension_numbers = #tpu.dot_dimension_numbers<[1], [0], [0], [1], [0, 0, 1, 1], [], []>} : vector<8x4xf32>, vector<4x256xf32>, vector<8x256xf32> -> vector<8x256xf32>
    %c0_12 = arith.constant 0 : index
    %c0_13 = arith.constant 0 : index
    %25 = vector.load %arg7[%c0_12, %c0_13] : memref<8x1xf32, #tpu.memory_space<vmem>>, vector<8x1xf32>
    %26 = vector.broadcast %25 : vector<8x1xf32> to vector<8x256xf32>
    %27 = arith.addf %24, %26 : vector<8x256xf32>
    %c0_14 = arith.constant 0 : index
    %c0_15 = arith.constant 0 : index
    %c0_16 = arith.constant 0 : index
    %28 = vector.load %arg8[%c0_14, %c0_15, %c0_16] : memref<1x8x256xf32, #tpu.memory_space<vmem>>, vector<1x8x256xf32>
    %29 = vector.shape_cast %28 : vector<1x8x256xf32> to vector<8x256xf32>
    %30 = vector.shape_cast %27 : vector<8x256xf32> to vector<1x8x256xf32>
    tpu.vector_store %arg8[%c0_14, %c0_15, %c0_16], %30 {strides = array<i32>} : memref<1x8x256xf32, #tpu.memory_space<vmem>>, vector<1x8x256xf32>,
    return
  }
  func.func @transform_0(%arg0: i32, %arg1: i32) -> i32 {
    %c0_i32 = arith.constant 0 : i32
    %c0_i32_0 = arith.constant 0 : i32
    return %c0_i32 : i32
  }
  func.func @transform_1(%arg0: i32, %arg1: i32) -> (i32, i32, i32) {
    %c0_i32 = arith.constant 0 : i32
    %c0_i32_0 = arith.constant 0 : i32
    return %arg0, %c0_i32, %arg1 : i32, i32, i32
  }
  func.func @transform_2(%arg0: i32, %arg1: i32) -> (i32, i32, i32) {
    %c0_i32 = arith.constant 0 : i32
    %c0_i32_0 = arith.constant 0 : i32
    return %arg0, %c0_i32, %arg1 : i32, i32, i32
  }
  func.func @transform_3(%arg0: i32, %arg1: i32) -> (i32, i32, i32) {
    %c0_i32 = arith.constant 0 : i32
    %c0_i32_0 = arith.constant 0 : i32
    return %arg0, %c0_i32, %arg1 : i32, i32, i32
  }
  func.func @transform_4(%arg0: i32, %arg1: i32) -> (i32, i32) {
    %c0_i32 = arith.constant 0 : i32
    %c0_i32_0 = arith.constant 0 : i32
    %c0_i32_1 = arith.constant 0 : i32
    return %c0_i32, %c0_i32_0 : i32, i32
  }
  func.func @transform_5(%arg0: i32, %arg1: i32) -> (i32, i32) {
    %c0_i32 = arith.constant 0 : i32
    %c0_i32_0 = arith.constant 0 : i32
    %c0_i32_1 = arith.constant 0 : i32
    return %c0_i32, %c0_i32_0 : i32, i32
  }
  func.func @transform_6(%arg0: i32, %arg1: i32) -> (i32, i32, i32) {
    %c0_i32 = arith.constant 0 : i32
    %c0_i32_0 = arith.constant 0 : i32
    return %arg0, %c0_i32, %arg1 : i32, i32, i32
  }
}

</mosaic_0001>

<llo_original>
// kernel: tpu_custom_call.1
$region0: #{tpu_custom_call.1}
  #allocation0 [shape = 'u32[]', space=smem, size = 0x4, offset = 0x4, fixed_abs, tag = 'smem constant byte address 0x4 - core index']
  #allocation1 [shape = 'u32[144,128]{1,0:T(1,128)}', space=vmem, size = 0x12000, scoped, tag = 'internal scratch']
  %s0 = inlined_call_operand.hbm [shape: f32[3], index: 0, kind: input, shape index: {}]
  %s1 = inlined_call_operand.vmem [shape: f32[2,4,256], index: 1, kind: input, shape index: {}]
  %s2 = inlined_call_operand.hbm [shape: f32[2,4,256], index: 2, kind: input, shape index: {}]
  %s3 = inlined_call_operand.vmem [shape: f32[2,4,256], index: 3, kind: input, shape index: {}]
  %s4 = inlined_call_operand.vmem [shape: f32[8,4], index: 4, kind: input, shape index: {}]
  %s5 = inlined_call_operand.vmem [shape: f32[8,1], index: 5, kind: input, shape index: {}]
  %s6 = inlined_call_operand.hbm [shape: f32[2,8,256], index: 6, kind: output, shape index: {}]
  %s7 = sld [smem:[#allocation0]]
  $region65: #{tpu_custom_call.1} parent=0
    _
  %s9 = ssub.s32 1, %s7
  %s10 = scalar_select 0, %s9, %s7
  $region1: #{tpu_custom_call.1} parent=0
    #allocation2 [shape = 'u8[512]{0}', space=smem, size = 0x200, scoped, tag = 'input window, operand 0, single buffered']
    #allocation3 [shape = 's32[2]{0}', space=sflag, size = 0x8, scoped, tag = 'scoped memory for tpu_custom_call.1']
    #allocation4 [shape = 's32[2]{0}', space=sflag, size = 0x8, scoped, tag = 'scoped memory for tpu_custom_call.1']
    #allocation5 [shape = 's32[2]{0}', space=sflag, size = 0x8, scoped, tag = 'scoped memory for tpu_custom_call.1']
    #allocation6 [shape = 'u8[8192]{0}', space=vmem, size = 0x2000, scoped, tag = 'input window, operand 2']
    #allocation7 [shape = 'u8[16384]{0}', space=vmem, size = 0x4000, scoped, tag = 'output window, operand 0']
    %11 = vsyncpa [#allocation5], 0
    %12 = vsyncpa [#allocation3], 0
    %s13 = scalar_lea.sflag [#allocation3], 1
    %14 = vsyncpa %s13, 0
    %15 = vsyncpa [#allocation4], 0
    %s16 = scalar_lea.sflag [#allocation4], 1
    %17 = vsyncpa %s16, 0
    loop: start=0, step=1, limit=4
    $region2: #{tpu_custom_call.1} parent=1 // loop_pre_header
      _
    $region3: #{tpu_custom_call.1} parent=1 // loop_header
      %s19 = sphi 0, %s23
      %p20 = scmp.ge.s32.totalorder %s19, 4
      %s26 = sphi 0, %s38
      %s27 = sphi 0, %s34
      %s28 = sphi 0, %s26
      %s29 = sphi 0, %s27
      %s30 = sphi 0, %s28
      %s31 = sphi 0, %s29
      %s39 = sphi 0, %s39
      %s41 = sphi 0, %s39
      %s42 = sphi 0, %s41
      %s56 = sphi 0, %s42
      %s64 = sphi 0, %s66
      %s67 = sphi 0, %s64
      %s68 = sphi 0, %s67
      %s84 = sphi 0, %s68
      %s92 = sphi 0, %s94
      %s95 = sphi 0, %s92
      %s96 = sphi 0, %s95
      %s112 = sphi 0, %s96
      %s120 = sphi 0, %s122
      %s123 = sphi 0, %s120
      %s124 = sphi 0, %s123
      %s140 = sphi 0, %s124
      %s144 = sphi 0, %s144
      %s146 = sphi 0, %s144
      %s147 = sphi 0, %s146
      %s161 = sphi 0, %s147
      %s165 = sphi 0, %s165
      %s167 = sphi 0, %s165
      %s168 = sphi 0, %s167
      %s182 = sphi 0, %s168
      %s190 = sphi 0, %s192
      %s193 = sphi 0, %s190
      %s194 = sphi 0, %s193
      %s210 = sphi 0, %s194
    $region4: #{tpu_custom_call.1} parent=1 // loop_header_branch
      %22 = sbr.rel (%p20) target = $region8
    $region5: #{tpu_custom_call.1} parent=1 // loop_body
      %s24 = ssub.s32 %s19, 1
      %s25 = ssub.s32 %s19, 2
      %s32 = sadd.s32 1, %s27
      %p33 = scmp.ge.s32.totalorder %s32, 1
      %s34 = scalar_select %p33, 0, %s32
      %s35 = sadd.s32 1, %s26
      %s36 = scalar_select %p33, %s35, %s26
      %p37 = scmp.ge.s32.totalorder %s36, 2
      %s38 = scalar_select %p37, 0, %s36
      %s40 = sadd.s32 %s39, 1
      %p43 = scmp.eq.s32.totalorder %s19, 1
      %p44 = scmp.ne.s32.totalorder %s39, %s41
      %p45 = scmp.eq.s32.totalorder %s19, 0
      %p46 = por %p44, %p45
      %p47 = scmp.ne.s32.totalorder %s39, %s41
      %p48 = scmp.eq.s32.totalorder %s24, 1
      %p49 = por %p47, %p48
      %p50 = scmp.ne.s32.totalorder %s41, %s42
      %p51 = scmp.eq.s32.totalorder %s24, 0
      %p52 = por %p50, %p51
      %p53 = scmp.ne.s32.totalorder %s41, %s42
      %p54 = scmp.eq.s32.totalorder %s25, 1
      %p55 = por %p53, %p54
      %p57 = scmp.ne.s32.totalorder %s42, %s56
      %p58 = scmp.eq.s32.totalorder %s25, 0
      %p59 = por %p57, %p58
      %s60 = ssub.s32 %s26, %s38
      %s61 = ssub.s32 %s27, %s34
      %s62 = sor.u32 %s60, %s61
      %p63 = scmp.eq.s32.totalorder %s62, 0
      %s65 = sadd.s32 %s64, 1
      %s66 = scalar_select %p63, %s64, %s65
      %p69 = pneg %p63
      %p70 = scmp.eq.s32.totalorder %s19, 1
      %p71 = por %p69, %p70
      %p72 = scmp.ne.s32.totalorder %s64, %s67
      %p73 = scmp.eq.s32.totalorder %s19, 0
      %p74 = por %p72, %p73
      %p75 = scmp.ne.s32.totalorder %s64, %s67
      %p76 = scmp.eq.s32.totalorder %s24, 1
      %p77 = por %p75, %p76
      %p78 = scmp.ne.s32.totalorder %s67, %s68
      %p79 = scmp.eq.s32.totalorder %s24, 0
      %p80 = por %p78, %p79
      %p81 = scmp.ne.s32.totalorder %s67, %s68
      %p82 = scmp.eq.s32.totalorder %s25, 1
      %p83 = por %p81, %p82
      %p85 = scmp.ne.s32.totalorder %s68, %s84
      %p86 = scmp.eq.s32.totalorder %s25, 0
      %p87 = por %p85, %p86
      %s88 = ssub.s32 %s26, %s38
      %s89 = ssub.s32 %s27, %s34
      %s90 = sor.u32 %s88, %s89
      %p91 = scmp.eq.s32.totalorder %s90, 0
      %s93 = sadd.s32 %s92, 1
      %s94 = scalar_select %p91, %s92, %s93
      %p97 = pneg %p91
      %p98 = scmp.eq.s32.totalorder %s19, 1
      %p99 = por %p97, %p98
      %p100 = scmp.ne.s32.totalorder %s92, %s95
      %p101 = scmp.eq.s32.totalorder %s19, 0
      %p102 = por %p100, %p101
      %p103 = scmp.ne.s32.totalorder %s92, %s95
      %p104 = scmp.eq.s32.totalorder %s24, 1
      %p105 = por %p103, %p104
      %p106 = scmp.ne.s32.totalorder %s95, %s96
      %p107 = scmp.eq.s32.totalorder %s24, 0
      %p108 = por %p106, %p107
      %p109 = scmp.ne.s32.totalorder %s95, %s96
      %p110 = scmp.eq.s32.totalorder %s25, 1
      %p111 = por %p109, %p110
      %p113 = scmp.ne.s32.totalorder %s96, %s112
      %p114 = scmp.eq.s32.totalorder %s25, 0
      %p115 = por %p113, %p114
      %s116 = ssub.s32 %s26, %s38
      %s117 = ssub.s32 %s27, %s34
      %s118 = sor.u32 %s116, %s117
      %p119 = scmp.eq.s32.totalorder %s118, 0
      %s121 = sadd.s32 %s120, 1
      %s122 = scalar_select %p119, %s120, %s121
      %p125 = pneg %p119
      %p126 = scmp.eq.s32.totalorder %s19, 1
      %p127 = por %p125, %p126
      %p128 = scmp.ne.s32.totalorder %s120, %s123
      %p129 = scmp.eq.s32.totalorder %s19, 0
      %p130 = por %p128, %p129
      %p131 = scmp.ne.s32.totalorder %s120, %s123
      %p132 = scmp.eq.s32.totalorder %s24, 1
      %p133 = por %p131, %p132
      %p134 = scmp.ne.s32.totalorder %s123, %s124
      %p135 = scmp.eq.s32.totalorder %s24, 0
      %p136 = por %p134, %p135
      %p137 = scmp.ne.s32.totalorder %s123, %s124
      %p138 = scmp.eq.s32.totalorder %s25, 1
      %p139 = por %p137, %p138
      %p141 = scmp.ne.s32.totalorder %s124, %s140
      %p142 = scmp.eq.s32.totalorder %s25, 0
      %p143 = por %p141, %p142
      %s145 = sadd.s32 %s144, 1
      %p148 = scmp.eq.s32.totalorder %s19, 1
      %p149 = scmp.ne.s32.totalorder %s144, %s146
      %p150 = scmp.eq.s32.totalorder %s19, 0
      %p151 = por %p149, %p150
      %p152 = scmp.ne.s32.totalorder %s144, %s146
      %p153 = scmp.eq.s32.totalorder %s24, 1
      %p154 = por %p152, %p153
      %p155 = scmp.ne.s32.totalorder %s146, %s147
      %p156 = scmp.eq.s32.totalorder %s24, 0
      %p157 = por %p155, %p156
      %p158 = scmp.ne.s32.totalorder %s146, %s147
      %p159 = scmp.eq.s32.totalorder %s25, 1
      %p160 = por %p158, %p159
      %p162 = scmp.ne.s32.totalorder %s147, %s161
      %p163 = scmp.eq.s32.totalorder %s25, 0
      %p164 = por %p162, %p163
      %s166 = sadd.s32 %s165, 1
      %p169 = scmp.eq.s32.totalorder %s19, 1
      %p170 = scmp.ne.s32.totalorder %s165, %s167
      %p171 = scmp.eq.s32.totalorder %s19, 0
      %p172 = por %p170, %p171
      %p173 = scmp.ne.s32.totalorder %s165, %s167
      %p174 = scmp.eq.s32.totalorder %s24, 1
      %p175 = por %p173, %p174
      %p176 = scmp.ne.s32.totalorder %s167, %s168
      %p177 = scmp.eq.s32.totalorder %s24, 0
      %p178 = por %p176, %p177
      %p179 = scmp.ne.s32.totalorder %s167, %s168
      %p180 = scmp.eq.s32.totalorder %s25, 1
      %p181 = por %p179, %p180
      %p183 = scmp.ne.s32.totalorder %s168, %s182
      %p184 = scmp.eq.s32.totalorder %s25, 0
      %p185 = por %p183, %p184
      %s186 = ssub.s32 %s26, %s38
      %s187 = ssub.s32 %s27, %s34
      %s188 = sor.u32 %s186, %s187
      %p189 = scmp.eq.s32.totalorder %s188, 0
      %s191 = sadd.s32 %s190, 1
      %s192 = scalar_select %p189, %s190, %s191
      %p195 = pneg %p189
      %p196 = scmp.eq.s32.totalorder %s19, 1
      %p197 = por %p195, %p196
      %p198 = scmp.ne.s32.totalorder %s190, %s193
      %p199 = scmp.eq.s32.totalorder %s19, 0
      %p200 = por %p198, %p199
      %p201 = scmp.ne.s32.totalorder %s190, %s193
      %p202 = scmp.eq.s32.totalorder %s24, 1
      %p203 = por %p201, %p202
      %p204 = scmp.ne.s32.totalorder %s193, %s194
      %p205 = scmp.eq.s32.totalorder %s24, 0
      %p206 = por %p204, %p205
      %p207 = scmp.ne.s32.totalorder %s193, %s194
      %p208 = scmp.eq.s32.totalorder %s25, 1
      %p209 = por %p207, %p208
      %p211 = scmp.ne.s32.totalorder %s194, %s210
      %p212 = scmp.eq.s32.totalorder %s25, 0
      %p213 = por %p211, %p212
      %p214 = scmp.le.s32.totalorder 1, %s19
      %p215 = scmp.lt.s32.totalorder %s19, 3
      %p216 = pnand %p214, %p215
      %p217 = pneg %p216
      // Predicated region
      $region9: #{tpu_custom_call.1} parent=5 // pred_check
        _
      $region10: #{tpu_custom_call.1} parent=5 // pred_check_branch
        %219 = sbr.rel (%p216) target = $region12
      $region11: #{tpu_custom_call.1} parent=5 // pred_region
        %s220 = ssub.s32 %s19, 1
        // Predicated region
        $region13: #{tpu_custom_call.1} parent=11 // pred_check
          %p221 = pneg %p52
        $region14: #{tpu_custom_call.1} parent=11 // pred_check_branch
          %223 = sbr.rel (%p221) target = $region16
        $region15: #{tpu_custom_call.1} parent=11 // pred_region
          %s225 = ssub.s32 16, 16
          %226 = vsyncadd [#allocation5], %s225
          %229 = dma.hbm_to_smem %s0, 16, [#allocation2], [#allocation5]
        $region16: #{tpu_custom_call.1} parent=11 // pred_fallthru
          _
        // Predicated region
        $region17: #{tpu_custom_call.1} parent=11 // pred_check
          %p230 = pneg %p157
        $region18: #{tpu_custom_call.1} parent=11 // pred_check_branch
          %232 = sbr.rel (%p230) target = $region20
        $region19: #{tpu_custom_call.1} parent=11 // pred_region
          _
        $region20: #{tpu_custom_call.1} parent=11 // pred_fallthru
          _
        // Predicated region
        $region21: #{tpu_custom_call.1} parent=11 // pred_check
          %p233 = pneg %p178
        $region22: #{tpu_custom_call.1} parent=11 // pred_check_branch
          %235 = sbr.rel (%p233) target = $region24
        $region23: #{tpu_custom_call.1} parent=11 // pred_region
          _
        $region24: #{tpu_custom_call.1} parent=11 // pred_fallthru
          _
      $region12: #{tpu_custom_call.1} parent=5 // pred_fallthru
        _
      %p236 = scmp.lt.s32.totalorder %s19, 2
      // Predicated region
      $region25: #{tpu_custom_call.1} parent=5 // pred_check
        %p237 = pneg %p236
      $region26: #{tpu_custom_call.1} parent=5 // pred_check_branch
        %239 = sbr.rel (%p237) target = $region28
      $region27: #{tpu_custom_call.1} parent=5 // pred_region
        // Predicated region
        $region29: #{tpu_custom_call.1} parent=27 // pred_check
          %p240 = pneg %p74
        $region30: #{tpu_custom_call.1} parent=27 // pred_check_branch
          %242 = sbr.rel (%p240) target = $region32
        $region31: #{tpu_custom_call.1} parent=27 // pred_region
          %s243 = smul.u32 2, %s27
          %p244 = scmp.lt.s32.totalorder %s26, 1
          %s245 = scalar_select %p244, %s26, 1
          %p246 = scmp.lt.s32.totalorder %s243, 1
          %s247 = scalar_select %p246, %s243, 1
          %s248 = smul.addr %s245, 2
          %s249 = sadd.s32 %s247, %s248
          %s250 = smul.addr %s249, 4
          %s251 = scalar_lea.vmem %s1, %s250
          %s252 = smul.u32 2, %s27
        $region32: #{tpu_custom_call.1} parent=27 // pred_fallthru
          _
        // Predicated region
        $region33: #{tpu_custom_call.1} parent=27 // pred_check
          %p253 = pneg %p102
        $region34: #{tpu_custom_call.1} parent=27 // pred_check_branch
          %255 = sbr.rel (%p253) target = $region36
        $region35: #{tpu_custom_call.1} parent=27 // pred_region
          %s256 = sand.u32 %s92, 1
          %s257 = scalar_lea.sflag [#allocation3], %s256
          %s258 = sand.u32 %s92, 1
          %s259 = smul.addr %s258, 8
          %s260 = scalar_lea.vmem [#allocation6], %s259
          %s261 = smul.u32 2, %s27
          %s263 = ssub.s32 128, 128
          %264 = vsyncadd %s257, %s263
          %s265 = smul.addr %s26, 2
          %s266 = sadd.s32 %s261, %s265
          %s267 = smul.addr %s266, 64
          %s268 = scalar_lea.hbm %s2, %s267
          %s270 = sshll.u32 %s260, 4
          %s271 = int_to_ptr.vmem [resolvable:$true] %s270
          %273 = dma.hbm_to_vmem [thread:$0]  %s268, 128, %s271, %s257
        $region36: #{tpu_custom_call.1} parent=27 // pred_fallthru
          _
        // Predicated region
        $region37: #{tpu_custom_call.1} parent=27 // pred_check
          %p274 = pneg %p130
        $region38: #{tpu_custom_call.1} parent=27 // pred_check_branch
          %276 = sbr.rel (%p274) target = $region40
        $region39: #{tpu_custom_call.1} parent=27 // pred_region
          %s277 = smul.u32 2, %s27
          %p278 = scmp.lt.s32.totalorder %s26, 1
          %s279 = scalar_select %p278, %s26, 1
          %p280 = scmp.lt.s32.totalorder %s277, 1
          %s281 = scalar_select %p280, %s277, 1
          %s282 = smul.addr %s279, 2
          %s283 = sadd.s32 %s281, %s282
          %s284 = smul.addr %s283, 4
          %s285 = scalar_lea.vmem %s3, %s284
          %s286 = smul.u32 2, %s27
        $region40: #{tpu_custom_call.1} parent=27 // pred_fallthru
          _
      $region28: #{tpu_custom_call.1} parent=5 // pred_fallthru
        _
      %p287 = scmp.le.s32.totalorder 1, %s19
      %p288 = scmp.lt.s32.totalorder %s19, 3
      %p289 = pnand %p287, %p288
      %p290 = pneg %p289
      // Predicated region
      $region41: #{tpu_custom_call.1} parent=5 // pred_check
        _
      $region42: #{tpu_custom_call.1} parent=5 // pred_check_branch
        %292 = sbr.rel (%p289) target = $region44
      $region43: #{tpu_custom_call.1} parent=5 // pred_region
        %s293 = ssub.s32 %s19, 1
        // Predicated region
        $region45: #{tpu_custom_call.1} parent=43 // pred_check
          %p294 = pneg %p52
        $region46: #{tpu_custom_call.1} parent=43 // pred_check_branch
          %296 = sbr.rel (%p294) target = $region48
        $region47: #{tpu_custom_call.1} parent=43 // pred_region
          %297 = dma.done [#allocation5], 16
        $region48: #{tpu_custom_call.1} parent=43 // pred_fallthru
          _
        %s298 = sand.u32 %s95, 1
        %s299 = scalar_lea.sflag [#allocation3], %s298
        %s300 = sand.u32 %s95, 1
        %s301 = smul.addr %s300, 8
        %s302 = scalar_lea.vmem [#allocation6], %s301
        // Predicated region
        $region49: #{tpu_custom_call.1} parent=43 // pred_check
          %p303 = pneg %p108
        $region50: #{tpu_custom_call.1} parent=43 // pred_check_branch
          %305 = sbr.rel (%p303) target = $region52
        $region51: #{tpu_custom_call.1} parent=43 // pred_region
          %306 = dma.done %s299, 128
        $region52: #{tpu_custom_call.1} parent=43 // pred_fallthru
          _
        %307 = sfence
        %p308 = pneg %p52
        %p309 = pneg %p49
        %s310 = smul.u32 2, %s29
        %p311 = scmp.lt.s32.totalorder %s28, 1
        %s312 = scalar_select %p311, %s28, 1
        %p313 = scmp.lt.s32.totalorder %s310, 1
        %s314 = scalar_select %p313, %s310, 1
        %s315 = smul.addr %s312, 2
        %s316 = sadd.s32 %s314, %s315
        %s317 = smul.addr %s316, 4
        %s318 = scalar_lea.vmem %s1, %s317
        %p319 = pneg %p80
        %p320 = pneg %p77
        %s321 = sand.u32 %s95, 1
        %s322 = scalar_lea.sflag [#allocation3], %s321
        %s323 = sand.u32 %s95, 1
        %s324 = smul.addr %s323, 8
        %s325 = scalar_lea.vmem [#allocation6], %s324
        %p326 = pneg %p108
        %p327 = pneg %p105
        %s328 = smul.u32 2, %s29
        %p329 = scmp.lt.s32.totalorder %s28, 1
        %s330 = scalar_select %p329, %s28, 1
        %p331 = scmp.lt.s32.totalorder %s328, 1
        %s332 = scalar_select %p331, %s328, 1
        %s333 = smul.addr %s330, 2
        %s334 = sadd.s32 %s332, %s333
        %s335 = smul.addr %s334, 4
        %s336 = scalar_lea.vmem %s3, %s335
        %p337 = pneg %p136
        %p338 = pneg %p133
        %p339 = pneg %p157
        %p340 = pneg %p154
        %p341 = pneg %p178
        %p342 = pneg %p175
        %p343 = pneg %p206
        %p344 = pneg %p203
        %s345 = sand.u32 %s193, 1
        %s346 = scalar_lea.sflag [#allocation4], %s345
        %s347 = sand.u32 %s193, 1
        %s348 = smul.addr %s347, 16
        %s349 = scalar_lea.vmem [#allocation7], %s348
        %s350 = smul.u32 2, %s29
        %p351 = scmp.lt.s32.totalorder %s28, 1
        %s352 = scalar_select %p351, %s28, 1
        %p353 = scmp.lt.s32.totalorder %s350, 1
        %s354 = scalar_select %p353, %s350, 1
        %s355 = smul.addr %s352, 2
        %s356 = sadd.s32 %s354, %s355
        %s357 = smul.addr %s356, 4
        %s358 = scalar_lea.vmem %s1, %s357
        %s359 = smul.u32 2, %s29
        %s360 = smul.u32 2, %s29
        %s361 = smul.u32 2, %s29
        %p362 = scmp.lt.s32.totalorder %s28, 1
        %s363 = scalar_select %p362, %s28, 1
        %p364 = scmp.lt.s32.totalorder %s361, 1
        %s365 = scalar_select %p364, %s361, 1
        %s366 = smul.addr %s363, 2
        %s367 = sadd.s32 %s365, %s366
        %s368 = smul.addr %s367, 4
        %s369 = scalar_lea.vmem %s3, %s368
        %s370 = smul.u32 2, %s29
        %s371 = smul.u32 2, %s29
        %s372 = sld [smem:[#allocation2]]
        %s373 = sld [smem:[#allocation2 + $0x1]]
        %s374 = sld [smem:[#allocation2 + $0x2]]
        %v375 = vld [vmem:[%s358] sm:$0xff]
        %v376 = vstv %s372
        %v377 = vmul.f32 %v376, %v375
        %v378 = vld [vmem:[%s302] sm:$0xff]
        %v379 = vstv %s373
        %v380 = vmul.f32 %v379, %v378
        %v381 = vadd.f32 %v377, %v380
        %v382 = vld [vmem:[%s369] sm:$0xff]
        %v383 = vstv %s374
        %v384 = vmul.f32 %v383, %v382
        %v385 = vadd.f32 %v381, %v384
        %v386 = vxor.u32 %v385, 2147483648
        %v387 = vmul.f32 %v386, 1.442695
        %v388 = vpow.pop %v387
        %v389 = vadd.f32 %v388, 1.0
        %v390 = vrcp.pop %v389
        %v391 = vmul.f32 1.0, %v390
        %v392 = vmul.f32 %v385, %v391
        %v393 = vld [vmem:[%s4] sm:$0xff]
        %v394 = vld [vmem:[%s5] sm:$0xff]
        %396 = vset.pattern.permute.xlu0 0
        %397 = vperm.xlu0 %396, %v394
        %v398 = vpop.permute.xlu0 %397
        %v401 = vcombine.high %v392, %v392
        %vm402 = vcmask 31744
        %v404 = vsel %vm402, %v393, 0
        %vm406 = vcmask 1043456
        %v407 = vsel %vm406, %v392, 0
        %v409 = vsel %vm406, %v401, 0
        %411 = vmatprep.subr.mxu0 %v409
        %412 = vmatpush1.msra.mxu0 %v407
        %413 = vmatprep.subr.mxu0 0.0
        %414 = vmatpush1.msra.mxu0 0.0
        %415 = vmatprep.subr.mxu0 0.0
        %416 = vmatpush1.msra.mxu0 0.0
        %417 = vmatprep.subr.mxu0 0.0
        %418 = vmatpush1.msra.mxu0 0.0
        %419 = vmatprep.subr.mxu0 0.0
        %420 = vmatpush1.msra.mxu0 0.0
        %421 = vmatprep.subr.mxu0 0.0
        %422 = vmatpush1.msra.mxu0 0.0
        %423 = vmatprep.subr.mxu0 0.0
        %424 = vmatpush1.msra.mxu0 0.0
        %425 = vmatprep.subr.mxu0 0.0
        %426 = vmatpush1.msra.mxu0 0.0
        %427 = vmatprep.subr.mxu0 0.0
        %428 = vmatpush1.msra.mxu0 0.0
        %429 = vmatprep.subr.mxu0 0.0
        %430 = vmatpush1.msra.mxu0 0.0
        %431 = vmatprep.subr.mxu0 0.0
        %432 = vmatpush1.msra.mxu0 0.0
        %433 = vmatprep.subr.mxu0 0.0
        %434 = vmatpush1.msra.mxu0 0.0
        %435 = vmatprep.subr.mxu0 0.0
        %436 = vmatpush1.msra.mxu0 0.0
        %437 = vmatprep.subr.mxu0 0.0
        %438 = vmatpush1.msra.mxu0 0.0
        %439 = vmatprep.subr.mxu0 0.0
        %440 = vmatpush1.msra.mxu0 0.0
        %441 = vmatprep.subr.mxu0 0.0
        %442 = vmatpush1.msra.mxu0 0.0
        %443 = vmatprep.subr.mxu0 0.0
        %444 = vmatpush1.msra.mxu0 0.0
        %445 = vmatprep.subr.mxu0 0.0
        %446 = vmatpush1.msra.mxu0 0.0
        %447 = vmatprep.subr.mxu0 0.0
        %448 = vmatpush1.msra.mxu0 0.0
        %449 = vmatprep.subr.mxu0 0.0
        %450 = vmatpush1.msra.mxu0 0.0
        %451 = vmatprep.subr.mxu0 0.0
        %452 = vmatpush1.msra.mxu0 0.0
        %453 = vmatprep.subr.mxu0 0.0
        %454 = vmatpush1.msra.mxu0 0.0
        %455 = vmatprep.subr.mxu0 0.0
        %456 = vmatpush1.msra.mxu0 0.0
        %457 = vmatprep.subr.mxu0 0.0
        %458 = vmatpush1.msra.mxu0 0.0
        %459 = vmatprep.subr.mxu0 0.0
        %460 = vmatpush1.msra.mxu0 0.0
        %461 = vmatprep.subr.mxu0 0.0
        %462 = vmatpush1.msra.mxu0 0.0
        %463 = vmatprep.subr.mxu0 0.0
        %464 = vmatpush1.msra.mxu0 0.0
        %465 = vmatprep.subr.mxu0 0.0
        %466 = vmatpush1.msra.mxu0 0.0
        %467 = vmatprep.subr.mxu0 0.0
        %468 = vmatpush1.msra.mxu0 0.0
        %469 = vmatprep.subr.mxu0 0.0
        %470 = vmatpush1.msra.mxu0 0.0
        %471 = vmatprep.subr.mxu0 0.0
        %472 = vmatpush1.msra.mxu0 0.0
        %473 = vmatprep.subr.mxu0 0.0
        %474 = vmatpush1.msra.mxu0 0.0
        %475 = vmatprep.mubr.f32.mxu0 0.0
        %476 = vmatmul.mubr.f32.gmra.mrb[0].mxu0 %v404
        %v477 = vpop.f32.mrb[0].mxu0
        %v478 = vadd.f32 %v398, %v477
        %v479 = vpop.f32.mrb[0].mxu0
        %v480 = vadd.f32 %v398, %v479
        %481 = vdwg.mxu0
        %482 = vst [vmem:[%s349] sm:$0xff] %v478
        %483 = vst [vmem:[%s349 + $0x8] sm:$0xff] %v480
        %s484 = sand.u32 %s193, 1
        %s485 = scalar_lea.sflag [#allocation4], %s484
        %s486 = sand.u32 %s193, 1
        %s487 = smul.addr %s486, 16
        %s488 = scalar_lea.vmem [#allocation7], %s487
        // Predicated region
        $region53: #{tpu_custom_call.1} parent=43 // pred_check
          %p489 = pneg %p203
        $region54: #{tpu_custom_call.1} parent=43 // pred_check_branch
          %491 = sbr.rel (%p489) target = $region56
        $region55: #{tpu_custom_call.1} parent=43 // pred_region
          %s492 = smul.u32 2, %s29
          %s494 = ssub.s32 256, 256
          %495 = vsyncadd %s485, %s494
          %s496 = smul.addr %s28, 2
          %s497 = sadd.s32 %s492, %s496
          %s498 = smul.addr %s497, 128
          %s499 = scalar_lea.hbm %s6, %s498
          %s501 = sshll.u32 %s488, 4
          %s502 = int_to_ptr.vmem [resolvable:$true] %s501
          %504 = dma.vmem_to_hbm [thread:$0]  %s502, 256, %s499, %s485
        $region56: #{tpu_custom_call.1} parent=43 // pred_fallthru
          _
      $region44: #{tpu_custom_call.1} parent=5 // pred_fallthru
        _
      %p505 = scmp.le.s32.totalorder 2, %s19
      // Predicated region
      $region57: #{tpu_custom_call.1} parent=5 // pred_check
        %p506 = pneg %p505
      $region58: #{tpu_custom_call.1} parent=5 // pred_check_branch
        %508 = sbr.rel (%p506) target = $region60
      $region59: #{tpu_custom_call.1} parent=5 // pred_region
        %s509 = ssub.s32 %s19, 2
        // Predicated region
        $region61: #{tpu_custom_call.1} parent=59 // pred_check
          %p510 = pneg %p209
        $region62: #{tpu_custom_call.1} parent=59 // pred_check_branch
          %512 = sbr.rel (%p510) target = $region64
        $region63: #{tpu_custom_call.1} parent=59 // pred_region
          %s513 = sand.u32 %s194, 1
          %s514 = scalar_lea.sflag [#allocation4], %s513
          %s515 = sand.u32 %s194, 1
          %s516 = smul.addr %s515, 16
          %s517 = scalar_lea.vmem [#allocation7], %s516
          %518 = dma.done %s514, 256
        $region64: #{tpu_custom_call.1} parent=59 // pred_fallthru
          _
      $region60: #{tpu_custom_call.1} parent=5 // pred_fallthru
        _
    $region6: #{tpu_custom_call.1} parent=1 // loop_footer
      %s23 = sadd.s32 1, %s19
    $region7: #{tpu_custom_call.1} parent=1 // loop_footer_branch
      %18 = sbr.rel target = $region3
    $region8: #{tpu_custom_call.1} parent=1 // loop_exit
      _
    %519 = vsyncpa [#allocation3], 1
    %s520 = scalar_lea.sflag [#allocation3], 1
    %521 = vsyncpa %s520, 1
    %522 = vsyncpa [#allocation4], 1
    %s523 = scalar_lea.sflag [#allocation4], 1
    %524 = vsyncpa %s523, 1
    %525 = vsyncpa [#allocation5], 1
    %s526 = scalar_lea.sflag [#allocation5], 1
    %527 = vsyncpa %s526, 1

</llo_original>
